<compile_context>
chip_gen: v7x
topology: tpu7x:2x2x1
jax: 0.10.0
libtpu: 0.0.40
codegen_flags: <defaults>
</compile_context>

<pallas_src>
import numpy as np
import jax
import jax.numpy as jnp
from jax.experimental import pallas as pl
from jax.experimental.pallas import tpu as pltpu


def _round_up(x, m):
    return ((x + m - 1) // m) * m


def _pick_row_tile(n, max_tile=512):
    """Row tile (multiple of 8) and padded row count, minimizing pad waste."""
    n8 = _round_up(max(int(n), 1), 8)
    if n8 <= max_tile:
        return n8, n8                      # single grid step, no extra pad
    return max_tile, _round_up(n8, max_tile)


# ---------------------------------------------------------------------------
# Kernel 1: row-tiled linear layer  (y = x @ W + b), bf16 MXU / f32 accumulate
# ---------------------------------------------------------------------------
def _linear_kernel(x_ref, w_ref, b_ref, o_ref):
    acc = jnp.dot(x_ref[...], w_ref[...], preferred_element_type=jnp.float32)
    o_ref[...] = (acc + b_ref[...]).astype(o_ref.dtype)


def pallas_linear(x, w_p, b_p, *, out_dtype=jnp.bfloat16, max_tile_rows=512):
    """Row-tiled y = x @ w_p + b_p.

    w_p: pre-padded [din_p, dout_p] bf16 (din_p, dout_p multiples of 128).
    b_p: [1, dout_p] f32 epilogue bias.
    Returns the row/column padded [n_p, dout_p] result in `out_dtype`
    (caller slices); emitting bf16 halves store / HBM writeback traffic.
    """
    n, din = x.shape
    din_p, dout_p = w_p.shape
    tile, n_p = _pick_row_tile(n, max_tile_rows)

    x_p = jnp.zeros((n_p, din_p), jnp.bfloat16).at[:n, :din].set(
        x.astype(jnp.bfloat16))

    out = pl.pallas_call(
        _linear_kernel,
        out_shape=jax.ShapeDtypeStruct((n_p, dout_p), out_dtype),
        grid=(n_p // tile,),
        in_specs=[
            pl.BlockSpec((tile, din_p), lambda i: (i, 0)),   # row tile of x
            pl.BlockSpec((din_p, dout_p), lambda i: (0, 0)),  # whole W (resident)
            pl.BlockSpec((1, dout_p), lambda i: (0, 0)),      # whole bias
        ],
        out_specs=pl.BlockSpec((tile, dout_p), lambda i: (i, 0)),
        # On v7x, pltpu.CORE_PARALLEL on this axis shards row tiles across the
        # 2 TensorCores; "parallel" is kept for portability across v5e/v6e.
        compiler_params=pltpu.CompilerParams(
            dimension_semantics=("parallel",)),
        cost_estimate=pl.CostEstimate(
            flops=2 * n_p * din_p * dout_p,
            transcendentals=0,
            bytes_accessed=(n_p * din_p * 2 + din_p * dout_p * 2 + dout_p * 4
                            + n_p * dout_p * jnp.dtype(out_dtype).itemsize)),
    )(x_p, w_p, b_p)
    return out


# ---------------------------------------------------------------------------
# Kernel 2: fused elu + output projection, both node types in one call
# ---------------------------------------------------------------------------
def _elu_project_kernel(x_ref, wo_ref, bo_ref, h_ref, logits_ref):
    # TODO(synk): MDPBMP_ctr_ntype_specific's GRU metapath-instance encoder and
    # DGL GAT message passing are not part of the provided source; the
    # surrogate uses the projected target features as every metapath encoding.
    # With identical per-metapath encodings, the inter-metapath attention
    # (fc1 -> tanh -> mean -> fc2 -> softmax -> weighted sum) has softmax
    # weights summing to 1 and is a numerical no-op, so it is omitted here:
    # h == elu(mp).  Reinstate it once real per-metapath encodings exist.
    h = jax.nn.elu(x_ref[...].astype(jnp.float32))           # [tile, d_p] f32
    h_ref[...] = h
    logits_ref[...] = (
        jnp.dot(h.astype(jnp.bfloat16), wo_ref[...],
                preferred_element_type=jnp.float32) + bo_ref[...])


def pallas_elu_project(x_stacked, wo_stacked, bo_stacked, *, tile):
    """x_stacked: [T, n_p, d_p] bf16, wo: [T, d_p, out_p] bf16, bo: [T,1,out_p]
    f32.  Grid = (types, row tiles); both axes independent ("parallel")."""
    t, n_p, d_p = x_stacked.shape
    out_p = wo_stacked.shape[-1]

    h, logits = pl.pallas_call(
        _elu_project_kernel,
        out_shape=(jax.ShapeDtypeStruct((t, n_p, d_p), jnp.float32),
                   jax.ShapeDtypeStruct((t, n_p, out_p), jnp.float32)),
        grid=(t, n_p // tile),
        in_specs=[
            pl.BlockSpec((None, tile, d_p), lambda ty, r: (ty, r, 0)),
            pl.BlockSpec((None, d_p, out_p), lambda ty, r: (ty, 0, 0)),
            pl.BlockSpec((None, 1, out_p), lambda ty, r: (ty, 0, 0)),
        ],
        out_specs=(
            pl.BlockSpec((None, tile, d_p), lambda ty, r: (ty, r, 0)),
            pl.BlockSpec((None, tile, out_p), lambda ty, r: (ty, r, 0)),
        ),
        compiler_params=pltpu.CompilerParams(
            dimension_semantics=("parallel", "parallel")),
        cost_estimate=pl.CostEstimate(
            flops=2 * t * n_p * d_p * out_p,
            transcendentals=t * n_p * d_p,               # elu exp
            bytes_accessed=(t * n_p * d_p * 2 + t * d_p * out_p * 2
                            + t * out_p * 4
                            + t * n_p * (d_p + out_p) * 4)),
    )(x_stacked, wo_stacked, bo_stacked)
    return h, logits


# ---------------------------------------------------------------------------
# Parameter initialization (deterministic, matches module __init__ shapes)
# ---------------------------------------------------------------------------
def xavier_normal(key, shape, gain=1.414):
    fan_in, fan_out = shape
    std = gain * np.sqrt(2.0 / (fan_in + fan_out))
    return (std * jax.random.normal(key, shape)).astype(jnp.float32)


def init_params(key, feats_dim_list, hidden_dim, out_dim, num_heads,
                attn_vec_dim):
    n_t = len(feats_dim_list)
    keys = jax.random.split(key, n_t + 6)
    d = hidden_dim * num_heads
    params = {"fc_list": []}
    for i, fd in enumerate(feats_dim_list):
        params["fc_list"].append(
            (xavier_normal(keys[i], (fd, hidden_dim)),
             jnp.zeros((hidden_dim,), jnp.float32)))
    # Inter-metapath attention params kept for module parity; the surrogate
    # forward is invariant to them (see TODO in _elu_project_kernel).
    params["miRNA_attn"] = (xavier_normal(keys[n_t], (d, attn_vec_dim)),
                            jnp.zeros((attn_vec_dim,), jnp.float32),
                            xavier_normal(keys[n_t + 1], (attn_vec_dim, 1)))
    params["disease_attn"] = (xavier_normal(keys[n_t + 2], (d, attn_vec_dim)),
                              jnp.zeros((attn_vec_dim,), jnp.float32),
                              xavier_normal(keys[n_t + 3], (attn_vec_dim, 1)))
    params["fc_miRNA"] = (xavier_normal(keys[n_t + 4], (d, out_dim)),
                          jnp.zeros((out_dim,), jnp.float32))
    params["fc_disease"] = (xavier_normal(keys[n_t + 5], (d, out_dim)),
                            jnp.zeros((out_dim,), jnp.float32))
    return params


def prepare_kernel_params(params, feats_dim_list, hidden_dim, out_dim,
                          num_heads):
    """Pad / cast / head-fold the static weights ONCE (not per forward call)."""
    num_types = len(feats_dim_list)
    d = hidden_dim * num_heads
    d_p = _round_up(d, 128)
    din_total = sum(feats_dim_list) + num_types       # + bias indicator columns
    din_p = _round_up(din_total, 128)
    out_p = _round_up(out_dim, 128)

    # Block-stacked input-projection weight with the num_heads tiling folded in
    # (columns replicated) and per-type bias rows selected by one-hot indicator
    # columns of x.  Bias rides the bf16 MXU path with f32 accumulation (small
    # precision deviation vs. a pure-f32 torch bias add).
    rows = [jnp.tile(w.astype(jnp.float32), (1, num_heads))
            for (w, _) in params["fc_list"]]
    rows += [jnp.tile(b.reshape(1, -1).astype(jnp.float32), (1, num_heads))
             for (_, b) in params["fc_list"]]
    w_all = jnp.concatenate(rows, axis=0)              # [din_total, d]
    w_in = jnp.zeros((din_p, d_p), jnp.bfloat16).at[:din_total, :d].set(
        w_all.astype(jnp.bfloat16))
    b_in_zero = jnp.zeros((1, d_p), jnp.float32)       # bias folded into w_in

    # Stacked fc_miRNA / fc_disease output projections (type-indexed in-kernel).
    wo = jnp.zeros((2, d_p, out_p), jnp.bfloat16)
    bo = jnp.zeros((2, 1, out_p), jnp.float32)
    for t, name in enumerate(("fc_miRNA", "fc_disease")):
        w, b = params[name]
        wo = wo.at[t, :d, :out_dim].set(w.astype(jnp.bfloat16))
        bo = bo.at[t, 0, :out_dim].set(b.astype(jnp.float32))

    return {"w_in": w_in, "b_in_zero": b_in_zero, "wo": wo, "bo": bo,
            "d": d, "d_p": d_p, "out_dim": out_dim, "out_p": out_p,
            "din_total": din_total}


# ---------------------------------------------------------------------------
# Forward pass (glue in plain JAX, compute in Pallas)
# ---------------------------------------------------------------------------
def mdpbmp_lp_forward(kparams, features_list, type_mask, target_idx_lists,
                      num_metapaths_list=None):
    """num_metapaths_list is accepted for interface parity; it is unused in the
    surrogate because the inter-metapath attention reduces to the identity."""
    num_types = len(features_list)
    din_list = [int(f.shape[1]) for f in features_list]
    din_total = kparams["din_total"]
    d, d_p = kparams["d"], kparams["d_p"]
    out_dim = kparams["out_dim"]

    # Block-diagonal feature layout + per-type one-hot bias-indicator columns:
    # all per-node-type input nn.Linear layers collapse into ONE Pallas matmul
    # whose weight already carries the num_heads head-tiling (lane-dense out).
    blocks, col = [], 0
    for i, feats in enumerate(features_list):
        n_i = feats.shape[0]
        blk = jnp.zeros((n_i, din_total), jnp.bfloat16)
        blk = blk.at[:, col:col + din_list[i]].set(feats.astype(jnp.bfloat16))
        blk = blk.at[:, sum(din_list) + i].set(1.0)     # selects this type's bias
        blocks.append(blk)
        col += din_list[i]
    x_all = jnp.concatenate(blocks, axis=0)             # [N_total, din_total]

    # Kernel 1: head-tiled projected features for every node, bf16 out.
    y = pallas_linear(x_all, kparams["w_in"], kparams["b_in_zero"])  # [n_p, d_p]

    # feat_drop: nn.Dropout is identity at inference time.

    # y rows are grouped by node type; map global node ids -> rows of y with a
    # static permutation, so target rows are gathered directly (no full
    # [N_total, hidden] scatter/materialization of `transformed_features`).
    perm = np.concatenate(
        [np.where(type_mask == i)[0] for i in range(num_types)])
    inv_perm = np.empty(perm.shape[0], np.int32)
    inv_perm[perm] = np.arange(perm.shape[0], dtype=np.int32)
    inv_perm = jnp.asarray(inv_perm)

    tgt_rows = [jnp.take(inv_perm, jnp.asarray(t, jnp.int32))
                for t in target_idx_lists]
    tgt_feats = [jnp.take(y, r, axis=0) for r in tgt_rows]   # [n_t, d_p] bf16

    n_m = int(target_idx_lists[0].shape[0])
    n_d = int(target_idx_lists[1].shape[0])
    tile, n_p = _pick_row_tile(max(n_m, n_d))
    x_stk = (jnp.zeros((2, n_p, d_p), jnp.bfloat16)
             .at[0, :n_m].set(tgt_feats[0])
             .at[1, :n_d].set(tgt_feats[1]))

    # Kernel 2: both node types + final fc in one row-tiled fused call.
    h_stk, logits_stk = pallas_elu_project(x_stk, kparams["wo"], kparams["bo"],
                                           tile=tile)

    h_miRNA = h_stk[0, :n_m, :d]
    h_disease = h_stk[1, :n_d, :d]
    logits_miRNA = logits_stk[0, :n_m, :out_dim]
    logits_disease = logits_stk[1, :n_d, :out_dim]
    return [logits_miRNA, logits_disease], [h_miRNA, h_disease]


# ---------------------------------------------------------------------------
if __name__ == "__main__":
    # small, deterministic synthetic setup
    feats_dim_list = [24, 40]        # miRNA / disease raw feature dims
    hidden_dim = 32
    out_dim = 16
    num_heads = 4                    # hidden * heads = 128 (lane-dense)
    attn_vec_dim = 32
    num_metapaths_list = [2, 2]
    n_miRNA, n_disease = 8, 8

    key = jax.random.PRNGKey(0)
    k_feat0, k_feat1, k_param = jax.random.split(key, 3)

    features_list = [
        jax.random.normal(k_feat0, (n_miRNA, feats_dim_list[0]), jnp.float32),
        jax.random.normal(k_feat1, (n_disease, feats_dim_list[1]), jnp.float32),
    ]
    type_mask = np.concatenate(
        [np.zeros(n_miRNA, np.int32), np.ones(n_disease, np.int32)]
    )
    # minibatch target node indices (global indices into the node set)
    target_idx_lists = [
        jnp.array([0, 2, 4, 6], jnp.int32),        # miRNA targets
        jnp.array([8, 10, 12, 14], jnp.int32),     # disease targets
    ]

    params = init_params(k_param, feats_dim_list, hidden_dim, out_dim,
                         num_heads, attn_vec_dim)
    kparams = prepare_kernel_params(params, feats_dim_list, hidden_dim,
                                    out_dim, num_heads)

    (logits, h) = mdpbmp_lp_forward(
        kparams, features_list, type_mask, target_idx_lists,
        num_metapaths_list)
    logits_miRNA, logits_disease = logits
    h_miRNA, h_disease = h

    jax.block_until_ready((logits_miRNA, logits_disease, h_miRNA, h_disease))

    assert logits_miRNA.shape == (4, out_dim)
    assert logits_disease.shape == (4, out_dim)
    assert h_miRNA.shape == (4, hidden_dim * num_heads)
    assert h_disease.shape == (4, hidden_dim * num_heads)
    assert bool(jnp.all(jnp.isfinite(logits_miRNA)))
    assert bool(jnp.all(jnp.isfinite(logits_disease)))
    assert bool(jnp.all(jnp.isfinite(h_miRNA)))
    assert bool(jnp.all(jnp.isfinite(h_disease)))
    print("KERNEL_OK")
</pallas_src>

<mosaic_0001>
module attributes {stable_mosaic.version = 11 : i64} {
  func.func @_linear_kernel(%arg0: i32, %arg1: memref<16x128xbf16, #tpu.memory_space<vmem>>, %arg2: memref<128x128xbf16, #tpu.memory_space<vmem>>, %arg3: memref<1x128xf32, #tpu.memory_space<vmem>>, %arg4: memref<16x128xbf16, #tpu.memory_space<vmem>>) attributes {dimension_semantics = [#tpu.dimension_semantics<parallel>], iteration_bounds = array<i64: 1>, scalar_prefetch = 0 : i64, scratch_operands = 0 : i64, tpu.core_type = #tpu.core_type<tc>, window_params = [{transform_indices = @transform_0, window_bounds = array<i64: 16, 128>}, {pipeline_mode = #tpu.pipeline_mode<synchronous>, transform_indices = @transform_1, window_bounds = array<i64: 128, 128>}, {pipeline_mode = #tpu.pipeline_mode<synchronous>, transform_indices = @transform_2, window_bounds = array<i64: 1, 128>}, {transform_indices = @transform_3, window_bounds = array<i64: 16, 128>}]} {
    %c0 = arith.constant 0 : index
    %c0_0 = arith.constant 0 : index
    %0 = vector.load %arg1[%c0, %c0_0] : memref<16x128xbf16, #tpu.memory_space<vmem>>, vector<16x128xbf16>
    %c0_1 = arith.constant 0 : index
    %c0_2 = arith.constant 0 : index
    %1 = vector.load %arg2[%c0_1, %c0_2] : memref<128x128xbf16, #tpu.memory_space<vmem>>, vector<128x128xbf16>
    %cst = arith.constant dense<0.000000e+00> : vector<16x128xf32>
    %2 = tpu.matmul %0, %1, %cst {dimension_numbers = #tpu.dot_dimension_numbers<[1], [0], [0], [1], [0, 0, 1, 1], [], []>} : vector<16x128xbf16>, vector<128x128xbf16>, vector<16x128xf32> -> vector<16x128xf32>
    %c0_3 = arith.constant 0 : index
    %c0_4 = arith.constant 0 : index
    %3 = vector.load %arg3[%c0_3, %c0_4] : memref<1x128xf32, #tpu.memory_space<vmem>>, vector<1x128xf32>
    %4 = vector.broadcast %3 : vector<1x128xf32> to vector<16x128xf32>
    %5 = arith.addf %2, %4 : vector<16x128xf32>
    %6 = arith.truncf %5 : vector<16x128xf32> to vector<16x128xbf16>
    %c0_5 = arith.constant 0 : index
    %c0_6 = arith.constant 0 : index
    %7 = vector.load %arg4[%c0_5, %c0_6] : memref<16x128xbf16, #tpu.memory_space<vmem>>, vector<16x128xbf16>
    tpu.vector_store %arg4[%c0_5, %c0_6], %6 {strides = array<i32>} : memref<16x128xbf16, #tpu.memory_space<vmem>>, vector<16x128xbf16>,
    return
  }
  func.func @transform_0(%arg0: i32) -> (i32, i32) {
    %c0_i32 = arith.constant 0 : i32
    %c0_i32_0 = arith.constant 0 : i32
    return %arg0, %c0_i32 : i32, i32
  }
  func.func @transform_1(%arg0: i32) -> (i32, i32) {
    %c0_i32 = arith.constant 0 : i32
    %c0_i32_0 = arith.constant 0 : i32
    %c0_i32_1 = arith.constant 0 : i32
    return %c0_i32, %c0_i32_0 : i32, i32
  }
  func.func @transform_2(%arg0: i32) -> (i32, i32) {
    %c0_i32 = arith.constant 0 : i32
    %c0_i32_0 = arith.constant 0 : i32
    %c0_i32_1 = arith.constant 0 : i32
    return %c0_i32, %c0_i32_0 : i32, i32
  }
  func.func @transform_3(%arg0: i32) -> (i32, i32) {
    %c0_i32 = arith.constant 0 : i32
    %c0_i32_0 = arith.constant 0 : i32
    return %arg0, %c0_i32 : i32, i32
  }
}

</mosaic_0001>

<llo_original>
// kernel: tpu_custom_call.1
$region0: #{tpu_custom_call.1}
  #allocation0 [shape = 'u32[]', space=smem, size = 0x4, offset = 0x4, fixed_abs, tag = 'smem constant byte address 0x4 - core index']
  #allocation1 [shape = 'u32[144,128]{1,0:T(1,128)}', space=vmem, size = 0x12000, scoped, tag = 'internal scratch']
  %s0 = inlined_call_operand.hbm [shape: bf16[16,128], index: 0, kind: input, shape index: {}]
  %s1 = inlined_call_operand.hbm [shape: bf16[128,128], index: 1, kind: input, shape index: {}]
  %s2 = inlined_call_operand.vmem [shape: f32[1,128], index: 2, kind: input, shape index: {}]
  %s3 = inlined_call_operand.hbm [shape: bf16[16,128], index: 3, kind: output, shape index: {}]
  %s4 = sld [smem:[#allocation0]]
  $region30: #{tpu_custom_call.1} parent=0
    _
  %s6 = ssub.s32 1, %s4
  %s7 = scalar_select 0, %s6, %s4
  $region1: #{tpu_custom_call.1} parent=0
    #allocation2 [shape = 'u8[4096]{0}', space=vmem, size = 0x1000, scoped, tag = 'input window, operand 0, single buffered']
    #allocation3 [shape = 's32[1]{0}', space=sflag, size = 0x4, scoped, tag = 'scoped memory for tpu_custom_call.1']
    #allocation4 [shape = 's32[1]{0}', space=sflag, size = 0x4, scoped, tag = 'scoped memory for tpu_custom_call.1']
    #allocation5 [shape = 'u8[32768]{0}', space=vmem, size = 0x8000, scoped, tag = 'input window, operand 1, single buffered']
    #allocation6 [shape = 's32[1]{0}', space=sflag, size = 0x4, scoped, tag = 'scoped memory for tpu_custom_call.1']
    #allocation7 [shape = 'u8[4096]{0}', space=vmem, size = 0x1000, scoped, tag = 'output window, operand 0, single buffered']
    %8 = vsyncpa [#allocation3], 0
    %9 = vsyncpa [#allocation6], 0
    %10 = vsyncpa [#allocation4], 0
    // Predicated region
    $region2: #{tpu_custom_call.1} parent=1 // pred_check
      _
    $region3: #{tpu_custom_call.1} parent=1 // pred_check_branch
      %12 = sbr.rel (0) target = $region5
    $region4: #{tpu_custom_call.1} parent=1 // pred_region
      %s14 = ssub.s32 128, 128
      %15 = vsyncadd [#allocation3], %s14
      %s16 = sshll.u32 [#allocation2], 4
      %s17 = int_to_ptr.vmem [resolvable:$true] %s16
      %22 = dma.hbm_to_vmem [thread:$0]  %s0, 128, %s17, [#allocation3], 64, 64, 4
    $region5: #{tpu_custom_call.1} parent=1 // pred_fallthru
      _
    // Predicated region
    $region6: #{tpu_custom_call.1} parent=1 // pred_check
      _
    $region7: #{tpu_custom_call.1} parent=1 // pred_check_branch
      %24 = sbr.rel (0) target = $region9
    $region8: #{tpu_custom_call.1} parent=1 // pred_region
      %s26 = ssub.s32 1024, 1024
      %27 = vsyncadd [#allocation6], %s26
      %s28 = sshll.u32 [#allocation5], 4
      %s29 = int_to_ptr.vmem [resolvable:$true] %s28
      %34 = dma.hbm_to_vmem [thread:$0]  %s1, 1024, %s29, [#allocation6], 64, 64, 4
    $region9: #{tpu_custom_call.1} parent=1 // pred_fallthru
      _
    // Predicated region
    $region10: #{tpu_custom_call.1} parent=1 // pred_check
      _
    $region11: #{tpu_custom_call.1} parent=1 // pred_check_branch
      %36 = sbr.rel (0) target = $region13
    $region12: #{tpu_custom_call.1} parent=1 // pred_region
      _
    $region13: #{tpu_custom_call.1} parent=1 // pred_fallthru
      _
    // Predicated region
    $region14: #{tpu_custom_call.1} parent=1 // pred_check
      _
    $region15: #{tpu_custom_call.1} parent=1 // pred_check_branch
      %38 = sbr.rel (0) target = $region17
    $region16: #{tpu_custom_call.1} parent=1 // pred_region
      %39 = dma.done [#allocation3], 128
    $region17: #{tpu_custom_call.1} parent=1 // pred_fallthru
      _
    // Predicated region
    $region18: #{tpu_custom_call.1} parent=1 // pred_check
      _
    $region19: #{tpu_custom_call.1} parent=1 // pred_check_branch
      %41 = sbr.rel (0) target = $region21
    $region20: #{tpu_custom_call.1} parent=1 // pred_region
      %42 = dma.done [#allocation6], 1024
    $region21: #{tpu_custom_call.1} parent=1 // pred_fallthru
      _
    %v44 = vld [vmem:[#allocation2] sm:$0xf]
    %v45 = vld [vmem:[#allocation2 + $0x4] sm:$0xf]
    %v46 = vld [vmem:[#allocation5] sm:$0xf]
    %v47 = vld [vmem:[#allocation5 + $0x4] sm:$0xf]
    %v48 = vld [vmem:[#allocation5 + $0x8] sm:$0xf]
    %v49 = vld [vmem:[#allocation5 + $0xc] sm:$0xf]
    %v50 = vld [vmem:[#allocation5 + $0x10] sm:$0xf]
    %v51 = vld [vmem:[#allocation5 + $0x14] sm:$0xf]
    %v52 = vld [vmem:[#allocation5 + $0x18] sm:$0xf]
    %v53 = vld [vmem:[#allocation5 + $0x1c] sm:$0xf]
    %v54 = vld [vmem:[#allocation5 + $0x20] sm:$0xf]
    %v55 = vld [vmem:[#allocation5 + $0x24] sm:$0xf]
    %v56 = vld [vmem:[#allocation5 + $0x28] sm:$0xf]
    %v57 = vld [vmem:[#allocation5 + $0x2c] sm:$0xf]
    %v58 = vld [vmem:[#allocation5 + $0x30] sm:$0xf]
    %v59 = vld [vmem:[#allocation5 + $0x34] sm:$0xf]
    %v60 = vld [vmem:[#allocation5 + $0x38] sm:$0xf]
    %v61 = vld [vmem:[#allocation5 + $0x3c] sm:$0xf]
    %v62 = vld [vmem:[%s2] sm:$0x1]
    %v64 = vlaneseq
    %v65 = vshrl.u32 %v64, 7
    %v66 = vsub.s32 0, %v65
    %v67 = vrot.slane %v62, %v66
    %v71 = vunpack.c.l.b16 %v44
    %v72 = vunpack.c.l.b16 %v45
    %v73 = vpack.c.b16 %v72, %v71
    %v91 = vunpack.c.l.b16 %v46
    %v92 = vunpack.c.l.b16 %v47
    %v93 = vunpack.c.l.b16 %v48
    %v94 = vunpack.c.l.b16 %v49
    %v95 = vunpack.c.l.b16 %v50
    %v96 = vunpack.c.l.b16 %v51
    %v97 = vunpack.c.l.b16 %v52
    %v98 = vunpack.c.l.b16 %v53
    %v99 = vunpack.c.l.b16 %v54
    %v100 = vunpack.c.l.b16 %v55
    %v101 = vunpack.c.l.b16 %v56
    %v102 = vunpack.c.l.b16 %v57
    %v103 = vunpack.c.l.b16 %v58
    %v104 = vunpack.c.l.b16 %v59
    %v105 = vunpack.c.l.b16 %v60
    %v106 = vunpack.c.l.b16 %v61
    %v107 = vpack.c.b16 %v92, %v91
    %v108 = vpack.c.b16 %v94, %v93
    %v109 = vpack.c.b16 %v96, %v95
    %v110 = vpack.c.b16 %v98, %v97
    %v111 = vpack.c.b16 %v100, %v99
    %v112 = vpack.c.b16 %v102, %v101
    %v113 = vpack.c.b16 %v104, %v103
    %v114 = vpack.c.b16 %v106, %v105
    %123 = vmatprep.subr.bf16.mxu0 0
    %124 = vmatpush1.bf16.msra.mxu0 %v107
    %125 = vmatprep.subr.bf16.mxu0 0
    %126 = vmatpush1.bf16.msra.mxu0 %v108
    %127 = vmatprep.subr.bf16.mxu0 0
    %128 = vmatpush1.bf16.msra.mxu0 %v109
    %129 = vmatprep.subr.bf16.mxu0 0
    %130 = vmatpush1.bf16.msra.mxu0 %v110
    %131 = vmatprep.subr.bf16.mxu0 0
    %132 = vmatpush1.bf16.msra.mxu0 %v111
    %133 = vmatprep.subr.bf16.mxu0 0
    %134 = vmatpush1.bf16.msra.mxu0 %v112
    %135 = vmatprep.subr.bf16.mxu0 0
    %136 = vmatpush1.bf16.msra.mxu0 %v113
    %137 = vmatprep.subr.bf16.mxu0 0
    %138 = vmatpush1.bf16.msra.mxu0 %v114
    %139 = vmatprep.subr.bf16.mxu0 0
    %140 = vmatpush1.bf16.msra.mxu0 0
    %141 = vmatprep.subr.bf16.mxu0 0
    %142 = vmatpush1.bf16.msra.mxu0 0
    %143 = vmatprep.subr.bf16.mxu0 0
    %144 = vmatpush1.bf16.msra.mxu0 0
    %145 = vmatprep.subr.bf16.mxu0 0
    %146 = vmatpush1.bf16.msra.mxu0 0
    %147 = vmatprep.subr.bf16.mxu0 0
    %148 = vmatpush1.bf16.msra.mxu0 0
    %149 = vmatprep.subr.bf16.mxu0 0
    %150 = vmatpush1.bf16.msra.mxu0 0
    %151 = vmatprep.subr.bf16.mxu0 0
    %152 = vmatpush1.bf16.msra.mxu0 0
    %153 = vmatprep.subr.bf16.mxu0 0
    %154 = vmatpush1.bf16.msra.mxu0 0
    %155 = vmatprep.mubr.bf16.mxu0 0
    %156 = vmatmul.mubr.bf16.gmra.mrb[0].mxu0 %v73
    %v157 = vpop.f32.mrb[0].mxu0
    %v158 = vadd.f32 %v67, %v157
    %v159 = vpop.f32.mrb[0].mxu0
    %v160 = vpop.f32.mrb[0].mxu0
    %v161 = vadd.f32 %v67, %v160
    %v162 = vpop.f32.mrb[0].mxu0
    %163 = vdwg.mxu0
    %v164 = vpack.c.bf16 %v161, %v158
    %v166 = vunpack.c.l.b16 %v164
    %v167 = vunpack.c.h.b16 %v164
    %v168 = vpack.c.b16 %v166, %v166
    %v169 = vpack.c.b16 %v167, %v167
    %172 = vst [vmem:[#allocation7] sm:$0xf] %v168
    %173 = vst [vmem:[#allocation7 + $0x4] sm:$0xf] %v169
    // Predicated region
    $region22: #{tpu_custom_call.1} parent=1 // pred_check
      _
    $region23: #{tpu_custom_call.1} parent=1 // pred_check_branch
      %175 = sbr.rel (0) target = $region25
    $region24: #{tpu_custom_call.1} parent=1 // pred_region
      %s177 = ssub.s32 128, 128
      %178 = vsyncadd [#allocation4], %s177
      %s179 = sshll.u32 [#allocation7], 4
      %s180 = int_to_ptr.vmem [resolvable:$true] %s179
      %185 = dma.vmem_to_hbm [thread:$0]  %s180, 128, %s3, [#allocation4], 64, 64, 4
    $region25: #{tpu_custom_call.1} parent=1 // pred_fallthru
      _
    // Predicated region
    $region26: #{tpu_custom_call.1} parent=1 // pred_check
      _
    $region27: #{tpu_custom_call.1} parent=1 // pred_check_branch
      %187 = sbr.rel (0) target = $region29
    $region28: #{tpu_custom_call.1} parent=1 // pred_region
      %188 = dma.done [#allocation4], 128
    $region29: #{tpu_custom_call.1} parent=1 // pred_fallthru
      _
    %189 = vsyncpa [#allocation3], 1
    %190 = vsyncpa [#allocation6], 1
    %191 = vsyncpa [#allocation4], 1

</llo_original>
